<compile_context>
chip_gen: v5e
topology: v5e:2x2
jax: 0.10.0
libtpu: 0.0.40
codegen_flags: <defaults>
</compile_context>

<pallas_src>
import jax
import jax.numpy as jnp
from jax.experimental import pallas as pl
from jax.experimental.pallas import tpu as pltpu


def _round_up(x, m):
    return (x + m - 1) // m * m


def mlp_kernel(x_ref, w1_ref, b1_ref, w2_ref, b2_ref, w3_ref, b3_ref, o_ref):
    cdt = w1_ref.dtype  # MXU operand dtype (bf16 by default), f32 accumulation
    # Layer 1: Linear(state_dim -> 256) + ReLU
    h = jnp.dot(x_ref[...].astype(cdt), w1_ref[...],
                preferred_element_type=jnp.float32)
    h = jnp.maximum(h + b1_ref[...], 0.0)
    # Layer 2: Linear(256 -> 256) + ReLU
    h = jnp.dot(h.astype(cdt), w2_ref[...], preferred_element_type=jnp.float32)
    h = jnp.maximum(h + b2_ref[...], 0.0)
    # Layer 3: Linear(256 -> state_dim_padded), no activation
    o = jnp.dot(h.astype(cdt), w3_ref[...], preferred_element_type=jnp.float32)
    o_ref[...] = (o + b3_ref[...]).astype(o_ref.dtype)


def mlp_forward(state, params, *, tile_b=None, compute_dtype=jnp.bfloat16,
                vmem_limit_bytes=48 * 1024 * 1024):
    """3-layer MLP (Linear-ReLU-Linear-ReLU-Linear) as one Pallas kernel,
    tiled over the batch dimension with lane-dense padded feature dims."""
    w1, b1, w2, b2, w3, b3 = params
    B, state_dim = state.shape
    hidden = w1.shape[1]

    # ---- lane-dense padding of the narrow feature dims (e.g. 32 -> 128) ----
    d_in_p = _round_up(state_dim, 128)
    d_out_p = _round_up(state_dim, 128)
    x = state
    if d_in_p != state_dim:
        x = jnp.pad(x, ((0, 0), (0, d_in_p - state_dim)))
        w1 = jnp.pad(w1, ((0, d_in_p - state_dim), (0, 0)))
    if d_out_p != state_dim:
        w3 = jnp.pad(w3, ((0, 0), (0, d_out_p - state_dim)))
        b3 = jnp.pad(b3, ((0, 0), (0, d_out_p - state_dim)))

    # ---- dtypes: bf16 MXU operands, f32 biases/accumulation -----------------
    w1 = w1.astype(compute_dtype)
    w2 = w2.astype(compute_dtype)
    w3 = w3.astype(compute_dtype)
    b1 = b1.astype(jnp.float32)
    b2 = b2.astype(jnp.float32)
    b3 = b3.astype(jnp.float32)

    # ---- batch tiling (handles ragged batches by zero-padding) --------------
    if tile_b is None:
        # Small batch: one grid step holds the whole batch.
        # Large batch: 512-row tiles -> grid >= 2, MXU well fed, both v7x TCs used.
        tile_b = _round_up(B, 8) if B <= 512 else 512
    B_p = _round_up(B, tile_b)
    if B_p != B:
        x = jnp.pad(x, ((0, B_p - B), (0, 0)))
    grid = (B_p // tile_b,)

    def _wspec(shape):
        # Grid-invariant operands: keep a single VMEM copy (no double buffer).
        return pl.BlockSpec(shape, lambda i: (0, 0), pipeline_mode=pl.Buffered(1))

    out = pl.pallas_call(
        mlp_kernel,
        out_shape=jax.ShapeDtypeStruct((B_p, d_out_p), state.dtype),
        grid_spec=pltpu.PrefetchScalarGridSpec(
            num_scalar_prefetch=0,
            grid=grid,
            in_specs=[
                pl.BlockSpec((tile_b, d_in_p), lambda i: (i, 0)),  # state tile
                _wspec((d_in_p, hidden)),                          # W1
                _wspec((1, hidden)),                               # b1
                _wspec((hidden, hidden)),                          # W2
                _wspec((1, hidden)),                               # b2
                _wspec((hidden, d_out_p)),                         # W3
                _wspec((1, d_out_p)),                              # b3
            ],
            out_specs=pl.BlockSpec((tile_b, d_out_p), lambda i: (i, 0)),
        ),
        compiler_params=pltpu.CompilerParams(
            dimension_semantics=("parallel",),
            vmem_limit_bytes=vmem_limit_bytes),
    )(x, w1, b1, w2, b2, w3, b3)

    return out[:B, :state_dim]


def init_params(key, state_dim, hidden=256, dtype=jnp.float32):
    """Deterministic init mirroring nn.Linear's uniform(-1/sqrt(fan_in), 1/sqrt(fan_in)).
    Weights are stored as (in, out)."""
    ks = jax.random.split(key, 6)

    def linear(kw, kb, fan_in, fan_out):
        bound = 1.0 / jnp.sqrt(fan_in)
        w = jax.random.uniform(kw, (fan_in, fan_out), dtype, -bound, bound)
        b = jax.random.uniform(kb, (1, fan_out), dtype, -bound, bound)
        return w, b

    w1, b1 = linear(ks[0], ks[1], state_dim, hidden)
    w2, b2 = linear(ks[2], ks[3], hidden, hidden)
    w3, b3 = linear(ks[4], ks[5], hidden, state_dim)
    return (w1, b1, w2, b2, w3, b3)


def mlp_reference(state, params, compute_dtype=jnp.bfloat16):
    """Pure-JAX reference mirroring the kernel's dtype path (bf16 operands,
    f32 accumulation) so the comparison checks the kernel, not quantization."""
    w1, b1, w2, b2, w3, b3 = params
    h = jnp.dot(state.astype(compute_dtype), w1.astype(compute_dtype),
                preferred_element_type=jnp.float32)
    h = jnp.maximum(h + b1.astype(jnp.float32), 0.0)
    h = jnp.dot(h.astype(compute_dtype), w2.astype(compute_dtype),
                preferred_element_type=jnp.float32)
    h = jnp.maximum(h + b2.astype(jnp.float32), 0.0)
    o = jnp.dot(h.astype(compute_dtype), w3.astype(compute_dtype),
                preferred_element_type=jnp.float32)
    return o + b3.astype(jnp.float32)


if __name__ == "__main__":
    key = jax.random.PRNGKey(0)
    k_param, k_state, k_big = jax.random.split(key, 3)

    state_dim = 32  # small state dimension, consistent with Model(state_dim)
    params = init_params(k_param, state_dim)

    # --- small-shape check: whole batch in one grid step ---------------------
    batch = 8
    state = jax.random.normal(k_state, (batch, state_dim), dtype=jnp.float32)
    out = jax.block_until_ready(mlp_forward(state, params))
    ref = mlp_reference(state, params)
    assert out.shape == (batch, state_dim)
    assert jnp.allclose(out, ref, atol=1e-3, rtol=1e-3), "mismatch vs reference (small)"

    # --- larger ragged batch: exercises 512-row tiles, grid=2, batch padding --
    big_batch = 1000
    state_big = jax.random.normal(k_big, (big_batch, state_dim), dtype=jnp.float32)
    out_big = jax.block_until_ready(mlp_forward(state_big, params))
    ref_big = mlp_reference(state_big, params)
    assert out_big.shape == (big_batch, state_dim)
    assert jnp.allclose(out_big, ref_big, atol=1e-3, rtol=1e-3), "mismatch vs reference (big)"

    print("KERNEL_OK")
</pallas_src>

<mosaic_0001>
module attributes {stable_mosaic.version = 11 : i64} {
  func.func @mlp_kernel(%arg0: i32, %arg1: memref<8x128xf32, #tpu.memory_space<vmem>>, %arg2: memref<128x256xbf16, #tpu.memory_space<vmem>>, %arg3: memref<1x256xf32, #tpu.memory_space<vmem>>, %arg4: memref<256x256xbf16, #tpu.memory_space<vmem>>, %arg5: memref<1x256xf32, #tpu.memory_space<vmem>>, %arg6: memref<256x128xbf16, #tpu.memory_space<vmem>>, %arg7: memref<1x128xf32, #tpu.memory_space<vmem>>, %arg8: memref<8x128xf32, #tpu.memory_space<vmem>>) attributes {dimension_semantics = [#tpu.dimension_semantics<parallel>], iteration_bounds = array<i64: 1>, scalar_prefetch = 0 : i64, scratch_operands = 0 : i64, tpu.core_type = #tpu.core_type<tc>, window_params = [{transform_indices = @transform_0, window_bounds = array<i64: 8, 128>}, {pipeline_mode = #tpu.pipeline_mode<synchronous>, transform_indices = @transform_1, window_bounds = array<i64: 128, 256>}, {pipeline_mode = #tpu.pipeline_mode<synchronous>, transform_indices = @transform_2, window_bounds = array<i64: 1, 256>}, {pipeline_mode = #tpu.pipeline_mode<synchronous>, transform_indices = @transform_3, window_bounds = array<i64: 256, 256>}, {pipeline_mode = #tpu.pipeline_mode<synchronous>, transform_indices = @transform_4, window_bounds = array<i64: 1, 256>}, {pipeline_mode = #tpu.pipeline_mode<synchronous>, transform_indices = @transform_5, window_bounds = array<i64: 256, 128>}, {pipeline_mode = #tpu.pipeline_mode<synchronous>, transform_indices = @transform_6, window_bounds = array<i64: 1, 128>}, {transform_indices = @transform_7, window_bounds = array<i64: 8, 128>}]} {
    %c0 = arith.constant 0 : index
    %c0_0 = arith.constant 0 : index
    %0 = vector.load %arg1[%c0, %c0_0] : memref<8x128xf32, #tpu.memory_space<vmem>>, vector<8x128xf32>
    %1 = arith.truncf %0 : vector<8x128xf32> to vector<8x128xbf16>
    %c0_1 = arith.constant 0 : index
    %c0_2 = arith.constant 0 : index
    %2 = vector.load %arg2[%c0_1, %c0_2] : memref<128x256xbf16, #tpu.memory_space<vmem>>, vector<128x256xbf16>
    %cst = arith.constant dense<0.000000e+00> : vector<8x256xf32>
    %3 = tpu.matmul %1, %2, %cst {dimension_numbers = #tpu.dot_dimension_numbers<[1], [0], [0], [1], [0, 0, 1, 1], [], []>} : vector<8x128xbf16>, vector<128x256xbf16>, vector<8x256xf32> -> vector<8x256xf32>
    %c0_3 = arith.constant 0 : index
    %c0_4 = arith.constant 0 : index
    %4 = vector.load %arg3[%c0_3, %c0_4] : memref<1x256xf32, #tpu.memory_space<vmem>>, vector<1x256xf32>
    %5 = vector.broadcast %4 : vector<1x256xf32> to vector<8x256xf32>
    %6 = arith.addf %3, %5 : vector<8x256xf32>
    %cst_5 = arith.constant 0.000000e+00 : f32
    %7 = vector.broadcast %cst_5 : f32 to vector<8x256xf32>
    %8 = arith.maximumf %6, %7 : vector<8x256xf32>
    %9 = arith.truncf %8 : vector<8x256xf32> to vector<8x256xbf16>
    %c0_6 = arith.constant 0 : index
    %c0_7 = arith.constant 0 : index
    %10 = vector.load %arg4[%c0_6, %c0_7] : memref<256x256xbf16, #tpu.memory_space<vmem>>, vector<256x256xbf16>
    %cst_8 = arith.constant dense<0.000000e+00> : vector<8x256xf32>
    %11 = tpu.matmul %9, %10, %cst_8 {dimension_numbers = #tpu.dot_dimension_numbers<[1], [0], [0], [1], [0, 0, 1, 1], [], []>} : vector<8x256xbf16>, vector<256x256xbf16>, vector<8x256xf32> -> vector<8x256xf32>
    %c0_9 = arith.constant 0 : index
    %c0_10 = arith.constant 0 : index
    %12 = vector.load %arg5[%c0_9, %c0_10] : memref<1x256xf32, #tpu.memory_space<vmem>>, vector<1x256xf32>
    %13 = vector.broadcast %12 : vector<1x256xf32> to vector<8x256xf32>
    %14 = arith.addf %11, %13 : vector<8x256xf32>
    %cst_11 = arith.constant 0.000000e+00 : f32
    %15 = vector.broadcast %cst_11 : f32 to vector<8x256xf32>
    %16 = arith.maximumf %14, %15 : vector<8x256xf32>
    %17 = arith.truncf %16 : vector<8x256xf32> to vector<8x256xbf16>
    %c0_12 = arith.constant 0 : index
    %c0_13 = arith.constant 0 : index
    %18 = vector.load %arg6[%c0_12, %c0_13] : memref<256x128xbf16, #tpu.memory_space<vmem>>, vector<256x128xbf16>
    %cst_14 = arith.constant dense<0.000000e+00> : vector<8x128xf32>
    %19 = tpu.matmul %17, %18, %cst_14 {dimension_numbers = #tpu.dot_dimension_numbers<[1], [0], [0], [1], [0, 0, 1, 1], [], []>} : vector<8x256xbf16>, vector<256x128xbf16>, vector<8x128xf32> -> vector<8x128xf32>
    %c0_15 = arith.constant 0 : index
    %c0_16 = arith.constant 0 : index
    %20 = vector.load %arg7[%c0_15, %c0_16] : memref<1x128xf32, #tpu.memory_space<vmem>>, vector<1x128xf32>
    %21 = vector.broadcast %20 : vector<1x128xf32> to vector<8x128xf32>
    %22 = arith.addf %19, %21 : vector<8x128xf32>
    %c0_17 = arith.constant 0 : index
    %c0_18 = arith.constant 0 : index
    %23 = vector.load %arg8[%c0_17, %c0_18] : memref<8x128xf32, #tpu.memory_space<vmem>>, vector<8x128xf32>
    tpu.vector_store %arg8[%c0_17, %c0_18], %22 {strides = array<i32>} : memref<8x128xf32, #tpu.memory_space<vmem>>, vector<8x128xf32>,
    return
  }
  func.func @transform_0(%arg0: i32) -> (i32, i32) {
    %c0_i32 = arith.constant 0 : i32
    %c0_i32_0 = arith.constant 0 : i32
    return %arg0, %c0_i32 : i32, i32
  }
  func.func @transform_1(%arg0: i32) -> (i32, i32) {
    %c0_i32 = arith.constant 0 : i32
    %c0_i32_0 = arith.constant 0 : i32
    %c0_i32_1 = arith.constant 0 : i32
    return %c0_i32, %c0_i32_0 : i32, i32
  }
  func.func @transform_2(%arg0: i32) -> (i32, i32) {
    %c0_i32 = arith.constant 0 : i32
    %c0_i32_0 = arith.constant 0 : i32
    %c0_i32_1 = arith.constant 0 : i32
    return %c0_i32, %c0_i32_0 : i32, i32
  }
  func.func @transform_3(%arg0: i32) -> (i32, i32) {
    %c0_i32 = arith.constant 0 : i32
    %c0_i32_0 = arith.constant 0 : i32
    %c0_i32_1 = arith.constant 0 : i32
    return %c0_i32, %c0_i32_0 : i32, i32
  }
  func.func @transform_4(%arg0: i32) -> (i32, i32) {
    %c0_i32 = arith.constant 0 : i32
    %c0_i32_0 = arith.constant 0 : i32
    %c0_i32_1 = arith.constant 0 : i32
    return %c0_i32, %c0_i32_0 : i32, i32
  }
  func.func @transform_5(%arg0: i32) -> (i32, i32) {
    %c0_i32 = arith.constant 0 : i32
    %c0_i32_0 = arith.constant 0 : i32
    %c0_i32_1 = arith.constant 0 : i32
    return %c0_i32, %c0_i32_0 : i32, i32
  }
  func.func @transform_6(%arg0: i32) -> (i32, i32) {
    %c0_i32 = arith.constant 0 : i32
    %c0_i32_0 = arith.constant 0 : i32
    %c0_i32_1 = arith.constant 0 : i32
    return %c0_i32, %c0_i32_0 : i32, i32
  }
  func.func @transform_7(%arg0: i32) -> (i32, i32) {
    %c0_i32 = arith.constant 0 : i32
    %c0_i32_0 = arith.constant 0 : i32
    return %arg0, %c0_i32 : i32, i32
  }
}

</mosaic_0001>

<llo_original>
// kernel: tpu_custom_call.1
$region0: #{tpu_custom_call.1}
  #allocation0 [shape = 'u32[]', space=smem, size = 0x4, offset = 0x4, fixed_abs, tag = 'smem constant byte address 0x4 - core index']
  #allocation1 [shape = 'u32[72,128]{1,0:T(1,128)}', space=vmem, size = 0x9000, scoped, tag = 'internal scratch']
  %s0 = inlined_call_operand.hbm [shape: f32[8,128], index: 0, kind: input, shape index: {}]
  %s1 = inlined_call_operand.hbm [shape: bf16[128,256], index: 1, kind: input, shape index: {}]
  %s2 = inlined_call_operand.hbm [shape: f32[1,256], index: 2, kind: input, shape index: {}]
  %s3 = inlined_call_operand.hbm [shape: bf16[256,256], index: 3, kind: input, shape index: {}]
  %s4 = inlined_call_operand.vmem [shape: f32[1,256], index: 4, kind: input, shape index: {}]
  %s5 = inlined_call_operand.hbm [shape: bf16[256,128], index: 5, kind: input, shape index: {}]
  %s6 = inlined_call_operand.vmem [shape: f32[1,128], index: 6, kind: input, shape index: {}]
  %s7 = inlined_call_operand.hbm [shape: f32[8,128], index: 7, kind: output, shape index: {}]
  %s8 = sld [smem:[#allocation0]]
  $region58: #{tpu_custom_call.1} parent=0
    _
  %s10 = ssub.s32 1, %s8
  %s11 = scalar_select 0, %s10, %s8
  $region1: #{tpu_custom_call.1} parent=0
    #allocation2 [shape = 'u8[4096]{0}', space=vmem, size = 0x1000, scoped, tag = 'input window, operand 0, single buffered']
    #allocation3 [shape = 's32[1]{0}', space=sflag, size = 0x4, scoped, tag = 'scoped memory for tpu_custom_call.1']
    #allocation4 [shape = 's32[1]{0}', space=sflag, size = 0x4, scoped, tag = 'scoped memory for tpu_custom_call.1']
    #allocation5 [shape = 'u8[65536]{0}', space=vmem, size = 0x10000, scoped, tag = 'input window, operand 1, single buffered']
    #allocation6 [shape = 's32[1]{0}', space=sflag, size = 0x4, scoped, tag = 'scoped memory for tpu_custom_call.1']
    #allocation7 [shape = 'u8[1024]{0}', space=vmem, size = 0x400, scoped, tag = 'input window, operand 2, single buffered']
    #allocation8 [shape = 'u8[131072]{0}', space=vmem, size = 0x20000, scoped, tag = 'input window, operand 3, single buffered']
    #allocation9 [shape = 's32[1]{0}', space=sflag, size = 0x4, scoped, tag = 'scoped memory for tpu_custom_call.1']
    #allocation10 [shape = 'u8[65536]{0}', space=vmem, size = 0x10000, scoped, tag = 'input window, operand 5, single buffered']
    #allocation11 [shape = 'u8[4096]{0}', space=vmem, size = 0x1000, scoped, tag = 'output window, operand 0, single buffered']
    %12 = vsyncpa [#allocation3], 0
    %13 = vsyncpa [#allocation6], 0
    %14 = vsyncpa [#allocation9], 0
    %15 = vsyncpa [#allocation4], 0
    // Predicated region
    $region2: #{tpu_custom_call.1} parent=1 // pred_check
      _
    $region3: #{tpu_custom_call.1} parent=1 // pred_check_branch
      %17 = sbr.rel (0) target = $region5
    $region4: #{tpu_custom_call.1} parent=1 // pred_region
      %19 = vsyncadd [#allocation3], 0
      %s21 = sshll.u32 %s0, 4
      %s22 = int_to_ptr.hbm [resolvable:$true] %s21
      %s23 = sshll.u32 [#allocation2], 4
      %s24 = int_to_ptr.vmem [resolvable:$true] %s23
      %26 = dma.hbm_to_vmem [thread:$0]  %s22, 128, %s24, [#allocation3]
    $region5: #{tpu_custom_call.1} parent=1 // pred_fallthru
      _
    // Predicated region
    $region6: #{tpu_custom_call.1} parent=1 // pred_check
      _
    $region7: #{tpu_custom_call.1} parent=1 // pred_check_branch
      %28 = sbr.rel (0) target = $region9
    $region8: #{tpu_custom_call.1} parent=1 // pred_region
      %30 = vsyncadd [#allocation6], 0
      %s31 = sshll.u32 %s1, 4
      %s32 = int_to_ptr.hbm [resolvable:$true] %s31
      %s33 = sshll.u32 [#allocation5], 4
      %s34 = int_to_ptr.vmem [resolvable:$true] %s33
      %39 = dma.hbm_to_vmem [thread:$0]  %s32, 2048, %s34, [#allocation6], 128, 128, 8
    $region9: #{tpu_custom_call.1} parent=1 // pred_fallthru
      _
    // Predicated region
    $region10: #{tpu_custom_call.1} parent=1 // pred_check
      _
    $region11: #{tpu_custom_call.1} parent=1 // pred_check_branch
      %41 = sbr.rel (0) target = $region13
    $region12: #{tpu_custom_call.1} parent=1 // pred_region
      %43 = vsyncadd [#allocation6], 0
      %s45 = sshll.u32 %s2, 4
      %s46 = int_to_ptr.hbm [resolvable:$true] %s45
      %s47 = sshll.u32 [#allocation7], 4
      %s48 = int_to_ptr.vmem [resolvable:$true] %s47
      %50 = dma.hbm_to_vmem [thread:$0]  %s46, 32, %s48, [#allocation6]
    $region13: #{tpu_custom_call.1} parent=1 // pred_fallthru
      _
    // Predicated region
    $region14: #{tpu_custom_call.1} parent=1 // pred_check
      _
    $region15: #{tpu_custom_call.1} parent=1 // pred_check_branch
      %52 = sbr.rel (0) target = $region17
    $region16: #{tpu_custom_call.1} parent=1 // pred_region
      %54 = vsyncadd [#allocation9], 0
      %s55 = sshll.u32 %s3, 4
      %s56 = int_to_ptr.hbm [resolvable:$true] %s55
      %s57 = sshll.u32 [#allocation8], 4
      %s58 = int_to_ptr.vmem [resolvable:$true] %s57
      %63 = dma.hbm_to_vmem [thread:$0]  %s56, 4096, %s58, [#allocation9], 128, 128, 8
    $region17: #{tpu_custom_call.1} parent=1 // pred_fallthru
      _
    // Predicated region
    $region18: #{tpu_custom_call.1} parent=1 // pred_check
      _
    $region19: #{tpu_custom_call.1} parent=1 // pred_check_branch
      %65 = sbr.rel (0) target = $region21
    $region20: #{tpu_custom_call.1} parent=1 // pred_region
      _
    $region21: #{tpu_custom_call.1} parent=1 // pred_fallthru
      _
    // Predicated region
    $region22: #{tpu_custom_call.1} parent=1 // pred_check
      _
    $region23: #{tpu_custom_call.1} parent=1 // pred_check_branch
      %67 = sbr.rel (0) target = $region25
    $region24: #{tpu_custom_call.1} parent=1 // pred_region
      %69 = vsyncadd [#allocation9], 0
      %s70 = sshll.u32 %s5, 4
      %s71 = int_to_ptr.hbm [resolvable:$true] %s70
      %s72 = sshll.u32 [#allocation10], 4
      %s73 = int_to_ptr.vmem [resolvable:$true] %s72
      %78 = dma.hbm_to_vmem [thread:$0]  %s71, 2048, %s73, [#allocation9], 64, 64, 4
    $region25: #{tpu_custom_call.1} parent=1 // pred_fallthru
      _
    // Predicated region
    $region26: #{tpu_custom_call.1} parent=1 // pred_check
      _
    $region27: #{tpu_custom_call.1} parent=1 // pred_check_branch
      %80 = sbr.rel (0) target = $region29
    $region28: #{tpu_custom_call.1} parent=1 // pred_region
      _
    $region29: #{tpu_custom_call.1} parent=1 // pred_fallthru
      _
    // Predicated region
    $region30: #{tpu_custom_call.1} parent=1 // pred_check
      _
    $region31: #{tpu_custom_call.1} parent=1 // pred_check_branch
      %82 = sbr.rel (0) target = $region33
    $region32: #{tpu_custom_call.1} parent=1 // pred_region
      %84 = dma.done [#allocation3], 128
    $region33: #{tpu_custom_call.1} parent=1 // pred_fallthru
      _
    // Predicated region
    $region34: #{tpu_custom_call.1} parent=1 // pred_check
      _
    $region35: #{tpu_custom_call.1} parent=1 // pred_check_branch
      %86 = sbr.rel (0) target = $region37
    $region36: #{tpu_custom_call.1} parent=1 // pred_region
      %88 = dma.done [#allocation6], 2048
    $region37: #{tpu_custom_call.1} parent=1 // pred_fallthru
      _
    // Predicated region
    $region38: #{tpu_custom_call.1} parent=1 // pred_check
      _
    $region39: #{tpu_custom_call.1} parent=1 // pred_check_branch
      %90 = sbr.rel (0) target = $region41
    $region40: #{tpu_custom_call.1} parent=1 // pred_region
      %92 = dma.done [#allocation6], 32
    $region41: #{tpu_custom_call.1} parent=1 // pred_fallthru
      _
    // Predicated region
    $region42: #{tpu_custom_call.1} parent=1 // pred_check
      _
    $region43: #{tpu_custom_call.1} parent=1 // pred_check_branch
      %94 = sbr.rel (0) target = $region45
    $region44: #{tpu_custom_call.1} parent=1 // pred_region
      %96 = dma.done [#allocation9], 4096
    $region45: #{tpu_custom_call.1} parent=1 // pred_fallthru
      _
    // Predicated region
    $region46: #{tpu_custom_call.1} parent=1 // pred_check
      _
    $region47: #{tpu_custom_call.1} parent=1 // pred_check_branch
      %98 = sbr.rel (0) target = $region49
    $region48: #{tpu_custom_call.1} parent=1 // pred_region
      %100 = dma.done [#allocation9], 2048
    $region49: #{tpu_custom_call.1} parent=1 // pred_fallthru
      _
    %v101 = vld [vmem:[#allocation2] sm:$0xff]
    %v102 = vpack.c.bf16 %v101, %v101
    %v103 = vld [vmem:[#allocation5] sm:$0xff]
    %v104 = vld [vmem:[#allocation5 + $0x8] sm:$0xff]
    %v105 = vld [vmem:[#allocation5 + $0x10] sm:$0xff]
    %v106 = vld [vmem:[#allocation5 + $0x18] sm:$0xff]
    %v107 = vld [vmem:[#allocation5 + $0x20] sm:$0xff]
    %v108 = vld [vmem:[#allocation5 + $0x28] sm:$0xff]
    %v109 = vld [vmem:[#allocation5 + $0x30] sm:$0xff]
    %v110 = vld [vmem:[#allocation5 + $0x38] sm:$0xff]
    %v111 = vld [vmem:[#allocation5 + $0x40] sm:$0xff]
    %v112 = vld [vmem:[#allocation5 + $0x48] sm:$0xff]
    %v113 = vld [vmem:[#allocation5 + $0x50] sm:$0xff]
    %v114 = vld [vmem:[#allocation5 + $0x58] sm:$0xff]
    %v115 = vld [vmem:[#allocation5 + $0x60] sm:$0xff]
    %v116 = vld [vmem:[#allocation5 + $0x68] sm:$0xff]
    %v117 = vld [vmem:[#allocation5 + $0x70] sm:$0xff]
    %v118 = vld [vmem:[#allocation5 + $0x78] sm:$0xff]
    %v119 = vld [vmem:[#allocation7] sm:$0x3]
    %v121 = vperm.slane %v119, 0
    %v122 = vperm.slane %v119, 1
    %v141 = vunpack.c.l.b16 %v103
    %v142 = vunpack.c.h.b16 %v103
    %v143 = vunpack.c.l.b16 %v104
    %v144 = vunpack.c.h.b16 %v104
    %v145 = vunpack.c.l.b16 %v105
    %v146 = vunpack.c.h.b16 %v105
    %v147 = vunpack.c.l.b16 %v106
    %v148 = vunpack.c.h.b16 %v106
    %v149 = vunpack.c.l.b16 %v107
    %v150 = vunpack.c.h.b16 %v107
    %v151 = vunpack.c.l.b16 %v108
    %v152 = vunpack.c.h.b16 %v108
    %v153 = vunpack.c.l.b16 %v109
    %v154 = vunpack.c.h.b16 %v109
    %v155 = vunpack.c.l.b16 %v110
    %v156 = vunpack.c.h.b16 %v110
    %v157 = vunpack.c.l.b16 %v111
    %v158 = vunpack.c.h.b16 %v111
    %v159 = vunpack.c.l.b16 %v112
    %v160 = vunpack.c.h.b16 %v112
    %v161 = vunpack.c.l.b16 %v113
    %v162 = vunpack.c.h.b16 %v113
    %v163 = vunpack.c.l.b16 %v114
    %v164 = vunpack.c.h.b16 %v114
    %v165 = vunpack.c.l.b16 %v115
    %v166 = vunpack.c.h.b16 %v115
    %v167 = vunpack.c.l.b16 %v116
    %v168 = vunpack.c.h.b16 %v116
    %v169 = vunpack.c.l.b16 %v117
    %v170 = vunpack.c.h.b16 %v117
    %v171 = vunpack.c.l.b16 %v118
    %v172 = vunpack.c.h.b16 %v118
    %v173 = vpack.c.b16 %v143, %v141
    %v174 = vpack.c.b16 %v144, %v142
    %v175 = vpack.c.b16 %v147, %v145
    %v176 = vpack.c.b16 %v148, %v146
    %v177 = vpack.c.b16 %v151, %v149
    %v178 = vpack.c.b16 %v152, %v150
    %v179 = vpack.c.b16 %v155, %v153
    %v180 = vpack.c.b16 %v156, %v154
    %v181 = vpack.c.b16 %v159, %v157
    %v182 = vpack.c.b16 %v160, %v158
    %v183 = vpack.c.b16 %v163, %v161
    %v184 = vpack.c.b16 %v164, %v162
    %v185 = vpack.c.b16 %v167, %v165
    %v186 = vpack.c.b16 %v168, %v166
    %v187 = vpack.c.b16 %v171, %v169
    %v188 = vpack.c.b16 %v172, %v170
    %205 = vmatpush.bf16.msra.mxu0 %v187
    %206 = vmatpush.bf16.msra.mxu0 %v185
    %207 = vmatpush.bf16.msra.mxu0 %v183
    %208 = vmatpush.bf16.msra.mxu0 %v181
    %209 = vmatpush.bf16.msra.mxu0 %v179
    %210 = vmatpush.bf16.msra.mxu0 %v177
    %211 = vmatpush.bf16.msra.mxu0 %v175
    %212 = vmatpush.bf16.msra.mxu0 %v173
    %213 = vmatmul.bf16.gmra.mxu0 %v102
    %v214 = vpop.f32.mrf.mxu0
    %v215 = vadd.f32 %v121, %v214
    %v216 = vpop.f32.mrf.mxu0
    %217 = vdwg.mxu0
    %218 = vmatpush.bf16.msra.mxu0 %v188
    %219 = vmatpush.bf16.msra.mxu0 %v186
    %220 = vmatpush.bf16.msra.mxu0 %v184
    %221 = vmatpush.bf16.msra.mxu0 %v182
    %222 = vmatpush.bf16.msra.mxu0 %v180
    %223 = vmatpush.bf16.msra.mxu0 %v178
    %224 = vmatpush.bf16.msra.mxu0 %v176
    %225 = vmatpush.bf16.msra.mxu0 %v174
    %226 = vmatmul.bf16.gmra.mxu0 %v102
    %v227 = vpop.f32.mrf.mxu0
    %v228 = vadd.f32 %v122, %v227
    %v229 = vpop.f32.mrf.mxu0
    %230 = vdwg.mxu0
    %v231 = vmax.f32 %v215, 0.0
    %v232 = vmax.f32 %v228, 0.0
    %v233 = vpack.c.bf16 %v231, %v231
    %v234 = vpack.c.bf16 %v232, %v232
    %v235 = vld [vmem:[#allocation8] sm:$0xff]
    %v236 = vld [vmem:[#allocation8 + $0x8] sm:$0xff]
    %v237 = vld [vmem:[#allocation8 + $0x10] sm:$0xff]
    %v238 = vld [vmem:[#allocation8 + $0x18] sm:$0xff]
    %v239 = vld [vmem:[#allocation8 + $0x20] sm:$0xff]
    %v240 = vld [vmem:[#allocation8 + $0x28] sm:$0xff]
    %v241 = vld [vmem:[#allocation8 + $0x30] sm:$0xff]
    %v242 = vld [vmem:[#allocation8 + $0x38] sm:$0xff]
    %v243 = vld [vmem:[#allocation8 + $0x40] sm:$0xff]
    %v244 = vld [vmem:[#allocation8 + $0x48] sm:$0xff]
    %v245 = vld [vmem:[#allocation8 + $0x50] sm:$0xff]
    %v246 = vld [vmem:[#allocation8 + $0x58] sm:$0xff]
    %v247 = vld [vmem:[#allocation8 + $0x60] sm:$0xff]
    %v248 = vld [vmem:[#allocation8 + $0x68] sm:$0xff]
    %v249 = vld [vmem:[#allocation8 + $0x70] sm:$0xff]
    %v250 = vld [vmem:[#allocation8 + $0x78] sm:$0xff]
    %v251 = vld [vmem:[#allocation8 + $0x80] sm:$0xff]
    %v252 = vld [vmem:[#allocation8 + $0x88] sm:$0xff]
    %v253 = vld [vmem:[#allocation8 + $0x90] sm:$0xff]
    %v254 = vld [vmem:[#allocation8 + $0x98] sm:$0xff]
    %v255 = vld [vmem:[#allocation8 + $0xa0] sm:$0xff]
    %v256 = vld [vmem:[#allocation8 + $0xa8] sm:$0xff]
    %v257 = vld [vmem:[#allocation8 + $0xb0] sm:$0xff]
    %v258 = vld [vmem:[#allocation8 + $0xb8] sm:$0xff]
    %v259 = vld [vmem:[#allocation8 + $0xc0] sm:$0xff]
    %v260 = vld [vmem:[#allocation8 + $0xc8] sm:$0xff]
    %v261 = vld [vmem:[#allocation8 + $0xd0] sm:$0xff]
    %v262 = vld [vmem:[#allocation8 + $0xd8] sm:$0xff]
    %v263 = vld [vmem:[#allocation8 + $0xe0] sm:$0xff]
    %v264 = vld [vmem:[#allocation8 + $0xe8] sm:$0xff]
    %v265 = vld [vmem:[#allocation8 + $0xf0] sm:$0xff]
    %v266 = vld [vmem:[#allocation8 + $0xf8] sm:$0xff]
    %v267 = vld [vmem:[%s4] sm:$0x3]
    %v269 = vperm.slane %v267, 0
    %v270 = vperm.slane %v267, 1
    %v305 = vunpack.c.l.b16 %v235
    %v306 = vunpack.c.h.b16 %v235
    %v307 = vunpack.c.l.b16 %v236
    %v308 = vunpack.c.h.b16 %v236
    %v309 = vunpack.c.l.b16 %v237
    %v310 = vunpack.c.h.b16 %v237
    %v311 = vunpack.c.l.b16 %v238
    %v312 = vunpack.c.h.b16 %v238
    %v313 = vunpack.c.l.b16 %v239
    %v314 = vunpack.c.h.b16 %v239
    %v315 = vunpack.c.l.b16 %v240
    %v316 = vunpack.c.h.b16 %v240
    %v317 = vunpack.c.l.b16 %v241
    %v318 = vunpack.c.h.b16 %v241
    %v319 = vunpack.c.l.b16 %v242
    %v320 = vunpack.c.h.b16 %v242
    %v321 = vunpack.c.l.b16 %v243
    %v322 = vunpack.c.h.b16 %v243
    %v323 = vunpack.c.l.b16 %v244
    %v324 = vunpack.c.h.b16 %v244
    %v325 = vunpack.c.l.b16 %v245
    %v326 = vunpack.c.h.b16 %v245
    %v327 = vunpack.c.l.b16 %v246
    %v328 = vunpack.c.h.b16 %v246
    %v329 = vunpack.c.l.b16 %v247
    %v330 = vunpack.c.h.b16 %v247
    %v331 = vunpack.c.l.b16 %v248
    %v332 = vunpack.c.h.b16 %v248
    %v333 = vunpack.c.l.b16 %v249
    %v334 = vunpack.c.h.b16 %v249
    %v335 = vunpack.c.l.b16 %v250
    %v336 = vunpack.c.h.b16 %v250
    %v337 = vunpack.c.l.b16 %v251
    %v338 = vunpack.c.h.b16 %v251
    %v339 = vunpack.c.l.b16 %v252
    %v340 = vunpack.c.h.b16 %v252
    %v341 = vunpack.c.l.b16 %v253
    %v342 = vunpack.c.h.b16 %v253
    %v343 = vunpack.c.l.b16 %v254
    %v344 = vunpack.c.h.b16 %v254
    %v345 = vunpack.c.l.b16 %v255
    %v346 = vunpack.c.h.b16 %v255
    %v347 = vunpack.c.l.b16 %v256
    %v348 = vunpack.c.h.b16 %v256
    %v349 = vunpack.c.l.b16 %v257
    %v350 = vunpack.c.h.b16 %v257
    %v351 = vunpack.c.l.b16 %v258
    %v352 = vunpack.c.h.b16 %v258
    %v353 = vunpack.c.l.b16 %v259
    %v354 = vunpack.c.h.b16 %v259
    %v355 = vunpack.c.l.b16 %v260
    %v356 = vunpack.c.h.b16 %v260
    %v357 = vunpack.c.l.b16 %v261
    %v358 = vunpack.c.h.b16 %v261
    %v359 = vunpack.c.l.b16 %v262
    %v360 = vunpack.c.h.b16 %v262
    %v361 = vunpack.c.l.b16 %v263
    %v362 = vunpack.c.h.b16 %v263
    %v363 = vunpack.c.l.b16 %v264
    %v364 = vunpack.c.h.b16 %v264
    %v365 = vunpack.c.l.b16 %v265
    %v366 = vunpack.c.h.b16 %v265
    %v367 = vunpack.c.l.b16 %v266
    %v368 = vunpack.c.h.b16 %v266
    %v369 = vpack.c.b16 %v307, %v305
    %v370 = vpack.c.b16 %v308, %v306
    %v371 = vpack.c.b16 %v311, %v309
    %v372 = vpack.c.b16 %v312, %v310
    %v373 = vpack.c.b16 %v315, %v313
    %v374 = vpack.c.b16 %v316, %v314
    %v375 = vpack.c.b16 %v319, %v317
    %v376 = vpack.c.b16 %v320, %v318
    %v377 = vpack.c.b16 %v323, %v321
    %v378 = vpack.c.b16 %v324, %v322
    %v379 = vpack.c.b16 %v327, %v325
    %v380 = vpack.c.b16 %v328, %v326
    %v381 = vpack.c.b16 %v331, %v329
    %v382 = vpack.c.b16 %v332, %v330
    %v383 = vpack.c.b16 %v335, %v333
    %v384 = vpack.c.b16 %v336, %v334
    %v385 = vpack.c.b16 %v339, %v337
    %v386 = vpack.c.b16 %v340, %v338
    %v387 = vpack.c.b16 %v343, %v341
    %v388 = vpack.c.b16 %v344, %v342
    %v389 = vpack.c.b16 %v347, %v345
    %v390 = vpack.c.b16 %v348, %v346
    %v391 = vpack.c.b16 %v351, %v349
    %v392 = vpack.c.b16 %v352, %v350
    %v393 = vpack.c.b16 %v355, %v353
    %v394 = vpack.c.b16 %v356, %v354
    %v395 = vpack.c.b16 %v359, %v357
    %v396 = vpack.c.b16 %v360, %v358
    %v397 = vpack.c.b16 %v363, %v361
    %v398 = vpack.c.b16 %v364, %v362
    %v399 = vpack.c.b16 %v367, %v365
    %v400 = vpack.c.b16 %v368, %v366
    %433 = vmatpush.bf16.msra.mxu0 %v383
    %434 = vmatpush.bf16.msra.mxu0 %v381
    %435 = vmatpush.bf16.msra.mxu0 %v379
    %436 = vmatpush.bf16.msra.mxu0 %v377
    %437 = vmatpush.bf16.msra.mxu0 %v375
    %438 = vmatpush.bf16.msra.mxu0 %v373
    %439 = vmatpush.bf16.msra.mxu0 %v371
    %440 = vmatpush.bf16.msra.mxu0 %v369
    %441 = vmatmul.bf16.gmra.mxu0 %v233
    %v442 = vpop.f32.mrf.mxu0
    %v443 = vadd.f32 %v269, %v442
    %v444 = vpop.f32.mrf.mxu0
    %445 = vdwg.mxu0
    %446 = vmatpush.bf16.msra.mxu0 %v399
    %447 = vmatpush.bf16.msra.mxu0 %v397
    %448 = vmatpush.bf16.msra.mxu0 %v395
    %449 = vmatpush.bf16.msra.mxu0 %v393
    %450 = vmatpush.bf16.msra.mxu0 %v391
    %451 = vmatpush.bf16.msra.mxu0 %v389
    %452 = vmatpush.bf16.msra.mxu0 %v387
    %453 = vmatpush.bf16.msra.mxu0 %v385
    %454 = vmatmul.bf16.gmra.mxu0 %v234
    %v455 = vpop.f32.mrf.mxu0
    %v456 = vadd.f32 %v443, %v455
    %v457 = vpop.f32.mrf.mxu0
    %458 = vdwg.mxu0
    %459 = vmatpush.bf16.msra.mxu0 %v384
    %460 = vmatpush.bf16.msra.mxu0 %v382
    %461 = vmatpush.bf16.msra.mxu0 %v380
    %462 = vmatpush.bf16.msra.mxu0 %v378
    %463 = vmatpush.bf16.msra.mxu0 %v376
    %464 = vmatpush.bf16.msra.mxu0 %v374
    %465 = vmatpush.bf16.msra.mxu0 %v372
    %466 = vmatpush.bf16.msra.mxu0 %v370
    %467 = vmatmul.bf16.gmra.mxu0 %v233
    %v468 = vpop.f32.mrf.mxu0
    %v469 = vadd.f32 %v270, %v468
    %v470 = vpop.f32.mrf.mxu0
    %471 = vdwg.mxu0
    %472 = vmatpush.bf16.msra.mxu0 %v400
    %473 = vmatpush.bf16.msra.mxu0 %v398
    %474 = vmatpush.bf16.msra.mxu0 %v396
    %475 = vmatpush.bf16.msra.mxu0 %v394
    %476 = vmatpush.bf16.msra.mxu0 %v392
    %477 = vmatpush.bf16.msra.mxu0 %v390
    %478 = vmatpush.bf16.msra.mxu0 %v388
    %479 = vmatpush.bf16.msra.mxu0 %v386
    %480 = vmatmul.bf16.gmra.mxu0 %v234
    %v481 = vpop.f32.mrf.mxu0
    %v482 = vadd.f32 %v469, %v481
    %v483 = vpop.f32.mrf.mxu0
    %484 = vdwg.mxu0
    %v485 = vmax.f32 %v456, 0.0
    %v486 = vmax.f32 %v482, 0.0
    %v487 = vpack.c.bf16 %v485, %v485
    %v488 = vpack.c.bf16 %v486, %v486
    %v489 = vld [vmem:[#allocation10] sm:$0xf]
    %v490 = vld [vmem:[#allocation10 + $0x4] sm:$0xf]
    %v491 = vld [vmem:[#allocation10 + $0x8] sm:$0xf]
    %v492 = vld [vmem:[#allocation10 + $0xc] sm:$0xf]
    %v493 = vld [vmem:[#allocation10 + $0x10] sm:$0xf]
    %v494 = vld [vmem:[#allocation10 + $0x14] sm:$0xf]
    %v495 = vld [vmem:[#allocation10 + $0x18] sm:$0xf]
    %v496 = vld [vmem:[#allocation10 + $0x1c] sm:$0xf]
    %v497 = vld [vmem:[#allocation10 + $0x20] sm:$0xf]
    %v498 = vld [vmem:[#allocation10 + $0x24] sm:$0xf]
    %v499 = vld [vmem:[#allocation10 + $0x28] sm:$0xf]
    %v500 = vld [vmem:[#allocation10 + $0x2c] sm:$0xf]
    %v501 = vld [vmem:[#allocation10 + $0x30] sm:$0xf]
    %v502 = vld [vmem:[#allocation10 + $0x34] sm:$0xf]
    %v503 = vld [vmem:[#allocation10 + $0x38] sm:$0xf]
    %v504 = vld [vmem:[#allocation10 + $0x3c] sm:$0xf]
    %v505 = vld [vmem:[#allocation10 + $0x40] sm:$0xf]
    %v506 = vld [vmem:[#allocation10 + $0x44] sm:$0xf]
    %v507 = vld [vmem:[#allocation10 + $0x48] sm:$0xf]
    %v508 = vld [vmem:[#allocation10 + $0x4c] sm:$0xf]
    %v509 = vld [vmem:[#allocation10 + $0x50] sm:$0xf]
    %v510 = vld [vmem:[#allocation10 + $0x54] sm:$0xf]
    %v511 = vld [vmem:[#allocation10 + $0x58] sm:$0xf]
    %v512 = vld [vmem:[#allocation10 + $0x5c] sm:$0xf]
    %v513 = vld [vmem:[#allocation10 + $0x60] sm:$0xf]
    %v514 = vld [vmem:[#allocation10 + $0x64] sm:$0xf]
    %v515 = vld [vmem:[#allocation10 + $0x68] sm:$0xf]
    %v516 = vld [vmem:[#allocation10 + $0x6c] sm:$0xf]
    %v517 = vld [vmem:[#allocation10 + $0x70] sm:$0xf]
    %v518 = vld [vmem:[#allocation10 + $0x74] sm:$0xf]
    %v519 = vld [vmem:[#allocation10 + $0x78] sm:$0xf]
    %v520 = vld [vmem:[#allocation10 + $0x7c] sm:$0xf]
    %v521 = vld [vmem:[%s6] sm:$0x1]
    %v523 = vperm.slane %v521, 0
    %v557 = vunpack.c.l.b16 %v489
    %v558 = vunpack.c.l.b16 %v490
    %v559 = vunpack.c.l.b16 %v491
    %v560 = vunpack.c.l.b16 %v492
    %v561 = vunpack.c.l.b16 %v493
    %v562 = vunpack.c.l.b16 %v494
    %v563 = vunpack.c.l.b16 %v495
    %v564 = vunpack.c.l.b16 %v496
    %v565 = vunpack.c.l.b16 %v497
    %v566 = vunpack.c.l.b16 %v498
    %v567 = vunpack.c.l.b16 %v499
    %v568 = vunpack.c.l.b16 %v500
    %v569 = vunpack.c.l.b16 %v501
    %v570 = vunpack.c.l.b16 %v502
    %v571 = vunpack.c.l.b16 %v503
    %v572 = vunpack.c.l.b16 %v504
    %v573 = vunpack.c.l.b16 %v505
    %v574 = vunpack.c.l.b16 %v506
    %v575 = vunpack.c.l.b16 %v507
    %v576 = vunpack.c.l.b16 %v508
    %v577 = vunpack.c.l.b16 %v509
    %v578 = vunpack.c.l.b16 %v510
    %v579 = vunpack.c.l.b16 %v511
    %v580 = vunpack.c.l.b16 %v512
    %v581 = vunpack.c.l.b16 %v513
    %v582 = vunpack.c.l.b16 %v514
    %v583 = vunpack.c.l.b16 %v515
    %v584 = vunpack.c.l.b16 %v516
    %v585 = vunpack.c.l.b16 %v517
    %v586 = vunpack.c.l.b16 %v518
    %v587 = vunpack.c.l.b16 %v519
    %v588 = vunpack.c.l.b16 %v520
    %v589 = vpack.c.b16 %v558, %v557
    %v590 = vpack.c.b16 %v560, %v559
    %v591 = vpack.c.b16 %v562, %v561
    %v592 = vpack.c.b16 %v564, %v563
    %v593 = vpack.c.b16 %v566, %v565
    %v594 = vpack.c.b16 %v568, %v567
    %v595 = vpack.c.b16 %v570, %v569
    %v596 = vpack.c.b16 %v572, %v571
    %v597 = vpack.c.b16 %v574, %v573
    %v598 = vpack.c.b16 %v576, %v575
    %v599 = vpack.c.b16 %v578, %v577
    %v600 = vpack.c.b16 %v580, %v579
    %v601 = vpack.c.b16 %v582, %v581
    %v602 = vpack.c.b16 %v584, %v583
    %v603 = vpack.c.b16 %v586, %v585
    %v604 = vpack.c.b16 %v588, %v587
    %621 = vmatpush.bf16.msra.mxu0 %v596
    %622 = vmatpush.bf16.msra.mxu0 %v595
    %623 = vmatpush.bf16.msra.mxu0 %v594
    %624 = vmatpush.bf16.msra.mxu0 %v593
    %625 = vmatpush.bf16.msra.mxu0 %v592
    %626 = vmatpush.bf16.msra.mxu0 %v591
    %627 = vmatpush.bf16.msra.mxu0 %v590
    %628 = vmatpush.bf16.msra.mxu0 %v589
    %629 = vmatmul.bf16.gmra.mxu0 %v487
    %v630 = vpop.f32.mrf.mxu0
    %v631 = vadd.f32 %v523, %v630
    %v632 = vpop.f32.mrf.mxu0
    %633 = vdwg.mxu0
    %634 = vmatpush.bf16.msra.mxu0 %v604
    %635 = vmatpush.bf16.msra.mxu0 %v603
    %636 = vmatpush.bf16.msra.mxu0 %v602
    %637 = vmatpush.bf16.msra.mxu0 %v601
    %638 = vmatpush.bf16.msra.mxu0 %v600
    %639 = vmatpush.bf16.msra.mxu0 %v599
    %640 = vmatpush.bf16.msra.mxu0 %v598
    %641 = vmatpush.bf16.msra.mxu0 %v597
    %642 = vmatmul.bf16.gmra.mxu0 %v488
    %v643 = vpop.f32.mrf.mxu0
    %v644 = vadd.f32 %v631, %v643
    %v645 = vpop.f32.mrf.mxu0
    %646 = vdwg.mxu0
    %647 = vst [vmem:[#allocation11] sm:$0xff] %v644
    // Predicated region
    $region50: #{tpu_custom_call.1} parent=1 // pred_check
      _
    $region51: #{tpu_custom_call.1} parent=1 // pred_check_branch
      %649 = sbr.rel (0) target = $region53
    $region52: #{tpu_custom_call.1} parent=1 // pred_region
      %651 = vsyncadd [#allocation4], 0
      %s653 = sshll.u32 [#allocation11], 4
      %s654 = int_to_ptr.vmem [resolvable:$true] %s653
      %s655 = sshll.u32 %s7, 4
      %s656 = int_to_ptr.hbm [resolvable:$true] %s655
      %658 = dma.vmem_to_hbm [thread:$0]  %s654, 128, %s656, [#allocation4]
    $region53: #{tpu_custom_call.1} parent=1 // pred_fallthru
      _
    // Predicated region
    $region54: #{tpu_custom_call.1} parent=1 // pred_check
      _
    $region55: #{tpu_custom_call.1} parent=1 // pred_check_branch
      %660 = sbr.rel (0) target = $region57
    $region56: #{tpu_custom_call.1} parent=1 // pred_region
      %662 = dma.done [#allocation4], 128
    $region57: #{tpu_custom_call.1} parent=1 // pred_fallthru
      _
    %663 = vsyncpa [#allocation3], 1
    %664 = vsyncpa [#allocation6], 1
    %665 = vsyncpa [#allocation9], 1
    %666 = vsyncpa [#allocation4], 1

</llo_original>
